<compile_context>
chip_gen: v7x
topology: tpu7x:2x2x1
jax: 0.10.0
libtpu: 0.0.40
codegen_flags: <defaults>
</compile_context>

<pallas_src>
import math

import jax
import jax.numpy as jnp
from jax.experimental import pallas as pl
from jax.experimental.pallas import tpu as pltpu

N_SHAPE = 40                      # shape latent dim
N_SIZE = 4                        # motion latent dim
N_LAT = N_SHAPE + N_SIZE          # 44 (classifier input width, packed [z | v])
N_ENC = 2 * N_LAT                 # 88 packed encoder outputs [mu_s|mu_m | lv_s|lv_m]
N_CLASSES = 10


def classifier_kernel(x_ref, y_ref, wx_ref, wy_ref, bias_ref, wc_ref, eps_ref, out_ref):
    # bf16 activations x bf16 weights, f32 accumulation on the MXU.
    h = (jnp.dot(x_ref[...], wx_ref[...], preferred_element_type=jnp.float32)
         + jnp.dot(y_ref[...], wy_ref[...], preferred_element_type=jnp.float32))

    b = bias_ref[...]                                  # (1, 98) f32
    h = h + b[:, :N_ENC]                               # (tb, 88) = [mu_z|mu_v | lv_z|lv_v]

    mu = h[:, :N_LAT]                                  # (tb, 44) packed [mu_z | mu_v]
    lv = h[:, N_LAT:]                                  # (tb, 44) packed [lv_z | lv_v]

    # reparameterize: latent = mu + eps * exp(0.5 * logvar); eps packed [eps_z | eps_v]
    lat = mu + eps_ref[...] * jnp.exp(0.5 * lv)        # (tb, 44) == cat([z, v], 1)

    # classify(cat([z, v], 1)) == lat @ Wc + bc  (single matmul, f32 weights)
    logits = jnp.dot(lat, wc_ref[...], preferred_element_type=jnp.float32) + b[:, N_ENC:]
    out_ref[...] = logits.astype(out_ref.dtype)


def _pick_batch_tile(B):
    """Largest batch tile: single step for small B, multiples of 256/128 otherwise."""
    if B <= 512:
        return B
    for t in (512, 256, 128):                          # 512/256 fill the 256-row MXU M-dim
        if B % t == 0:
            return t
    return 256                                         # tail batches get zero-padded


def classifier_combined_forward(x, y_true, packed, eps):
    """x, y_true: (B, C, H, W) (bf16 preferred, any float accepted);
    eps: (B, 44) = [eps_shape | eps_motion].  Returns logits (B, 10) float32."""
    B = x.shape[0]
    d_shape = x.shape[1] * x.shape[2] * x.shape[3]

    x_flat = x.reshape(B, d_shape)                     # free reshape (row-major)
    y_flat = y_true.reshape(B, d_shape)
    if x_flat.dtype != jnp.bfloat16:                   # producer should already hand bf16
        x_flat = x_flat.astype(jnp.bfloat16)
    if y_flat.dtype != jnp.bfloat16:
        y_flat = y_flat.astype(jnp.bfloat16)
    eps = eps.astype(jnp.float32)

    wx, wy, bias, wc = packed["wx"], packed["wy"], packed["bias"], packed["wc"]

    tile_b = _pick_batch_tile(B)
    n_steps = pl.cdiv(B, tile_b)
    b_pad = n_steps * tile_b
    if b_pad != B:                                     # zero-pad ragged tail, slice after
        pad = b_pad - B
        x_flat = jnp.pad(x_flat, ((0, pad), (0, 0)))
        y_flat = jnp.pad(y_flat, ((0, pad), (0, 0)))
        eps = jnp.pad(eps, ((0, pad), (0, 0)))
    grid = (n_steps,)

    def batch_spec(d):
        return pl.BlockSpec((tile_b, d), lambda i: (i, 0))

    def resident_spec(arr):                            # same block every step -> one DMA
        return pl.BlockSpec(arr.shape, lambda i: (0, 0))

    cost = pl.CostEstimate(
        flops=2 * b_pad * d_shape * N_ENC * 2 + 2 * b_pad * N_LAT * N_CLASSES,
        transcendentals=b_pad * N_LAT,
        bytes_accessed=(x_flat.size * 2 + y_flat.size * 2          # bf16 activations
                        + wx.size * 2 + wy.size * 2                 # bf16 encoder weights
                        + bias.size * 4 + wc.size * 4               # f32 epilogue operands
                        + eps.size * 4 + b_pad * N_CLASSES * 4),
    )

    out = pl.pallas_call(
        classifier_kernel,
        out_shape=jax.ShapeDtypeStruct((b_pad, N_CLASSES), jnp.float32),
        grid_spec=pltpu.PrefetchScalarGridSpec(
            num_scalar_prefetch=0,
            grid=grid,
            in_specs=[
                batch_spec(d_shape),      # x_flat   (B, Ds) bf16
                batch_spec(d_shape),      # y_flat   (B, Ds) bf16
                resident_spec(wx),        # (Ds, 88) bf16
                resident_spec(wy),        # (Ds, 88) bf16 (zero-padded shape columns)
                resident_spec(bias),      # (1, 98)  f32
                resident_spec(wc),        # (44, 10) f32
                batch_spec(N_LAT),        # eps (B, 44) f32
            ],
            out_specs=pl.BlockSpec((tile_b, N_CLASSES), lambda i: (i, 0)),
        ),
        compiler_params=pltpu.CompilerParams(
            dimension_semantics=("parallel",)),
        cost_estimate=cost,
    )(x_flat, y_flat, wx, wy, bias, wc, eps)

    return out[:B]


def _linear_init(key, fan_in, fan_out):
    """PyTorch nn.Linear-style uniform(-1/sqrt(fan_in), 1/sqrt(fan_in)) init."""
    kw, kb = jax.random.split(key)
    bound = 1.0 / math.sqrt(fan_in)
    w = jax.random.uniform(kw, (fan_in, fan_out), jnp.float32, -bound, bound)
    b = jax.random.uniform(kb, (1, fan_out), jnp.float32, -bound, bound)
    return w, b


def make_params(key, d_motion, d_shape):
    keys = jax.random.split(key, 5)
    wm_mu, bm_mu = _linear_init(keys[0], d_motion, N_SIZE)
    wm_lv, bm_lv = _linear_init(keys[1], d_motion, N_SIZE)
    ws_mu, bs_mu = _linear_init(keys[2], d_shape, N_SHAPE)
    ws_lv, bs_lv = _linear_init(keys[3], d_shape, N_SHAPE)
    wc, bc = _linear_init(keys[4], N_LAT, N_CLASSES)

    raw = {"wm_mu": wm_mu, "bm_mu": bm_mu, "wm_lv": wm_lv, "bm_lv": bm_lv,
           "ws_mu": ws_mu, "bs_mu": bs_mu, "ws_lv": ws_lv, "bs_lv": bs_lv,
           "wc": wc, "bc": bc}

    # Pack for the kernel.  in_motion = cat([x, y], 1).view(B, -1): rows [:d_shape]
    # of the motion weight multiply x, rows [d_shape:] multiply y (NCHW layout).
    # Column order [mu_s | mu_m | lv_s | lv_m] so reparameterize yields packed [z|v].
    wx = jnp.concatenate([ws_mu, wm_mu[:d_shape], ws_lv, wm_lv[:d_shape]], axis=1)  # (Ds, 88)
    z40 = jnp.zeros((d_shape, N_SHAPE), jnp.float32)
    wy = jnp.concatenate([z40, wm_mu[d_shape:], z40, wm_lv[d_shape:]], axis=1)      # (Ds, 88)
    bias = jnp.concatenate([bs_mu, bm_mu, bs_lv, bm_lv, bc], axis=1)                # (1, 98)
    packed = {
        "wx": wx.astype(jnp.bfloat16),
        "wy": wy.astype(jnp.bfloat16),
        "bias": bias,
        # classifier weight kept whole (44, 10) f32: rows [:40] hit z, [40:] hit v,
        # matching the packed latent order (cat order in forward is [z, v]).
        "wc": wc,
    }
    return raw, packed


def _reference(x, y_true, raw, eps_s, eps_m):
    """Pure-JAX f32 reference matching the PyTorch forward (upcasts bf16 inputs)."""
    B = x.shape[0]
    xf = x.astype(jnp.float32)
    yf = y_true.astype(jnp.float32)
    xm = jnp.concatenate([xf, yf], axis=1).reshape(B, -1)
    xs = xf.reshape(B, -1)
    mu_m = xm @ raw["wm_mu"] + raw["bm_mu"]
    lv_m = xm @ raw["wm_lv"] + raw["bm_lv"]
    v = mu_m + eps_m * jnp.exp(0.5 * lv_m)
    mu_s = xs @ raw["ws_mu"] + raw["bs_mu"]
    lv_s = xs @ raw["ws_lv"] + raw["bs_lv"]
    z = mu_s + eps_s * jnp.exp(0.5 * lv_s)
    tangle = jnp.concatenate([z, v], axis=1)
    return tangle @ raw["wc"] + raw["bc"]


if __name__ == "__main__":
    B, C, H, W = 2, 4, 16, 16
    d_shape = C * H * W          # 1024
    d_motion = 2 * d_shape       # 2048

    root = jax.random.PRNGKey(0)
    kx, ky, kp, kem, kes = jax.random.split(root, 5)

    # Producer-side bf16 inputs (perf review opt #1): halves the dominant activation
    # DMA and removes the in-kernel cast pass.
    x = jax.random.normal(kx, (B, C, H, W), jnp.float32).astype(jnp.bfloat16)
    y_true = jax.random.normal(ky, (B, C, H, W), jnp.float32).astype(jnp.bfloat16)
    raw, packed = make_params(kp, d_motion, d_shape)

    # reparameterize eps ~ N(0, 1), drawn deterministically outside the kernel.
    # TODO(synk): could draw eps in-kernel with pltpu.prng_seed/prng_random_bits to trim
    # an operand if bitwise parity with torch.randn_like is not required.
    eps_m = jax.random.normal(kem, (B, N_SIZE), jnp.float32)
    eps_s = jax.random.normal(kes, (B, N_SHAPE), jnp.float32)
    eps = jnp.concatenate([eps_s, eps_m], axis=1)               # (B, 44) = [eps_z | eps_v]

    out = classifier_combined_forward(x, y_true, packed, eps)
    out = jax.block_until_ready(out)

    ref = _reference(x, y_true, raw, eps_s, eps_m)
    assert out.shape == (B, N_CLASSES)
    # bf16 encoder weights inside the kernel (f32 accumulation; bf16 logvar is amplified
    # by exp(0.5*lv)) -> loosened tolerance vs the pure-f32 reference.
    assert jnp.allclose(out, ref, atol=5e-2, rtol=5e-2), \
        f"max abs err = {float(jnp.max(jnp.abs(out - ref)))}"

    print("KERNEL_OK")
</pallas_src>

<mosaic_0001>
module attributes {stable_mosaic.version = 11 : i64} {
  func.func @classifier_kernel(%arg0: i32, %arg1: memref<2x1024xbf16, #tpu.memory_space<vmem>>, %arg2: memref<2x1024xbf16, #tpu.memory_space<vmem>>, %arg3: memref<1024x88xbf16, #tpu.memory_space<vmem>>, %arg4: memref<1024x88xbf16, #tpu.memory_space<vmem>>, %arg5: memref<1x98xf32, #tpu.memory_space<vmem>>, %arg6: memref<44x10xf32, #tpu.memory_space<vmem>>, %arg7: memref<2x44xf32, #tpu.memory_space<vmem>>, %arg8: memref<2x10xf32, #tpu.memory_space<vmem>>) attributes {dimension_semantics = [#tpu.dimension_semantics<parallel>], iteration_bounds = array<i64: 1>, scalar_prefetch = 0 : i64, scratch_operands = 0 : i64, tpu.core_type = #tpu.core_type<tc>, window_params = [{transform_indices = @transform_0, window_bounds = array<i64: 2, 1024>}, {transform_indices = @transform_1, window_bounds = array<i64: 2, 1024>}, {pipeline_mode = #tpu.pipeline_mode<synchronous>, transform_indices = @transform_2, window_bounds = array<i64: 1024, 88>}, {pipeline_mode = #tpu.pipeline_mode<synchronous>, transform_indices = @transform_3, window_bounds = array<i64: 1024, 88>}, {pipeline_mode = #tpu.pipeline_mode<synchronous>, transform_indices = @transform_4, window_bounds = array<i64: 1, 98>}, {pipeline_mode = #tpu.pipeline_mode<synchronous>, transform_indices = @transform_5, window_bounds = array<i64: 44, 10>}, {transform_indices = @transform_6, window_bounds = array<i64: 2, 44>}, {transform_indices = @transform_7, window_bounds = array<i64: 2, 10>}]} {
    %c0 = arith.constant 0 : index
    %c0_0 = arith.constant 0 : index
    %0 = vector.load %arg1[%c0, %c0_0] : memref<2x1024xbf16, #tpu.memory_space<vmem>>, vector<2x1024xbf16>
    %c0_1 = arith.constant 0 : index
    %c0_2 = arith.constant 0 : index
    %1 = vector.load %arg3[%c0_1, %c0_2] : memref<1024x88xbf16, #tpu.memory_space<vmem>>, vector<1024x88xbf16>
    %cst = arith.constant dense<0.000000e+00> : vector<2x88xf32>
    %2 = tpu.matmul %0, %1, %cst {dimension_numbers = #tpu.dot_dimension_numbers<[1], [0], [0], [1], [0, 0, 1, 1], [], []>} : vector<2x1024xbf16>, vector<1024x88xbf16>, vector<2x88xf32> -> vector<2x88xf32>
    %c0_3 = arith.constant 0 : index
    %c0_4 = arith.constant 0 : index
    %3 = vector.load %arg2[%c0_3, %c0_4] : memref<2x1024xbf16, #tpu.memory_space<vmem>>, vector<2x1024xbf16>
    %c0_5 = arith.constant 0 : index
    %c0_6 = arith.constant 0 : index
    %4 = vector.load %arg4[%c0_5, %c0_6] : memref<1024x88xbf16, #tpu.memory_space<vmem>>, vector<1024x88xbf16>
    %cst_7 = arith.constant dense<0.000000e+00> : vector<2x88xf32>
    %5 = tpu.matmul %3, %4, %cst_7 {dimension_numbers = #tpu.dot_dimension_numbers<[1], [0], [0], [1], [0, 0, 1, 1], [], []>} : vector<2x1024xbf16>, vector<1024x88xbf16>, vector<2x88xf32> -> vector<2x88xf32>
    %6 = arith.addf %2, %5 : vector<2x88xf32>
    %c0_8 = arith.constant 0 : index
    %c0_9 = arith.constant 0 : index
    %7 = vector.load %arg5[%c0_8, %c0_9] : memref<1x98xf32, #tpu.memory_space<vmem>>, vector<1x98xf32>
    %8 = vector.extract_strided_slice %7 {offsets = [0, 0], sizes = [1, 88], strides = [1, 1]} : vector<1x98xf32> to vector<1x88xf32>
    %9 = vector.broadcast %8 : vector<1x88xf32> to vector<2x88xf32>
    %10 = arith.addf %6, %9 : vector<2x88xf32>
    %11 = vector.extract_strided_slice %10 {offsets = [0, 0], sizes = [2, 44], strides = [1, 1]} : vector<2x88xf32> to vector<2x44xf32>
    %12 = vector.extract_strided_slice %10 {offsets = [0, 44], sizes = [2, 44], strides = [1, 1]} : vector<2x88xf32> to vector<2x44xf32>
    %c0_10 = arith.constant 0 : index
    %c0_11 = arith.constant 0 : index
    %13 = vector.load %arg7[%c0_10, %c0_11] : memref<2x44xf32, #tpu.memory_space<vmem>>, vector<2x44xf32>
    %cst_12 = arith.constant 5.000000e-01 : f32
    %14 = vector.broadcast %cst_12 : f32 to vector<2x44xf32>
    %15 = arith.mulf %14, %12 : vector<2x44xf32>
    %16 = math.exp %15 : vector<2x44xf32>
    %17 = arith.mulf %13, %16 : vector<2x44xf32>
    %18 = arith.addf %11, %17 : vector<2x44xf32>
    %c0_13 = arith.constant 0 : index
    %c0_14 = arith.constant 0 : index
    %19 = vector.load %arg6[%c0_13, %c0_14] : memref<44x10xf32, #tpu.memory_space<vmem>>, vector<44x10xf32>
    %cst_15 = arith.constant dense<0.000000e+00> : vector<2x10xf32>
    %20 = tpu.matmul %18, %19, %cst_15 {dimension_numbers = #tpu.dot_dimension_numbers<[1], [0], [0], [1], [0, 0, 1, 1], [], []>} : vector<2x44xf32>, vector<44x10xf32>, vector<2x10xf32> -> vector<2x10xf32>
    %21 = vector.extract_strided_slice %7 {offsets = [0, 88], sizes = [1, 10], strides = [1, 1]} : vector<1x98xf32> to vector<1x10xf32>
    %22 = vector.broadcast %21 : vector<1x10xf32> to vector<2x10xf32>
    %23 = arith.addf %20, %22 : vector<2x10xf32>
    %c0_16 = arith.constant 0 : index
    %c0_17 = arith.constant 0 : index
    %24 = vector.load %arg8[%c0_16, %c0_17] : memref<2x10xf32, #tpu.memory_space<vmem>>, vector<2x10xf32>
    tpu.vector_store %arg8[%c0_16, %c0_17], %23 {strides = array<i32>} : memref<2x10xf32, #tpu.memory_space<vmem>>, vector<2x10xf32>,
    return
  }
  func.func @transform_0(%arg0: i32) -> (i32, i32) {
    %c0_i32 = arith.constant 0 : i32
    %c0_i32_0 = arith.constant 0 : i32
    return %arg0, %c0_i32 : i32, i32
  }
  func.func @transform_1(%arg0: i32) -> (i32, i32) {
    %c0_i32 = arith.constant 0 : i32
    %c0_i32_0 = arith.constant 0 : i32
    return %arg0, %c0_i32 : i32, i32
  }
  func.func @transform_2(%arg0: i32) -> (i32, i32) {
    %c0_i32 = arith.constant 0 : i32
    %c0_i32_0 = arith.constant 0 : i32
    %c0_i32_1 = arith.constant 0 : i32
    return %c0_i32, %c0_i32_0 : i32, i32
  }
  func.func @transform_3(%arg0: i32) -> (i32, i32) {
    %c0_i32 = arith.constant 0 : i32
    %c0_i32_0 = arith.constant 0 : i32
    %c0_i32_1 = arith.constant 0 : i32
    return %c0_i32, %c0_i32_0 : i32, i32
  }
  func.func @transform_4(%arg0: i32) -> (i32, i32) {
    %c0_i32 = arith.constant 0 : i32
    %c0_i32_0 = arith.constant 0 : i32
    %c0_i32_1 = arith.constant 0 : i32
    return %c0_i32, %c0_i32_0 : i32, i32
  }
  func.func @transform_5(%arg0: i32) -> (i32, i32) {
    %c0_i32 = arith.constant 0 : i32
    %c0_i32_0 = arith.constant 0 : i32
    %c0_i32_1 = arith.constant 0 : i32
    return %c0_i32, %c0_i32_0 : i32, i32
  }
  func.func @transform_6(%arg0: i32) -> (i32, i32) {
    %c0_i32 = arith.constant 0 : i32
    %c0_i32_0 = arith.constant 0 : i32
    return %arg0, %c0_i32 : i32, i32
  }
  func.func @transform_7(%arg0: i32) -> (i32, i32) {
    %c0_i32 = arith.constant 0 : i32
    %c0_i32_0 = arith.constant 0 : i32
    return %arg0, %c0_i32 : i32, i32
  }
}

</mosaic_0001>

<llo_original>
// kernel: tpu_custom_call.1
$region0: #{tpu_custom_call.1}
  #allocation0 [shape = 'u32[]', space=smem, size = 0x4, offset = 0x4, fixed_abs, tag = 'smem constant byte address 0x4 - core index']
  #allocation1 [shape = 'u32[144,128]{1,0:T(1,128)}', space=vmem, size = 0x12000, scoped, tag = 'internal scratch']
  %s0 = inlined_call_operand.vmem [shape: bf16[2,1024], index: 0, kind: input, shape index: {}]
  %s1 = inlined_call_operand.vmem [shape: bf16[2,1024], index: 1, kind: input, shape index: {}]
  %s2 = inlined_call_operand.vmem [shape: bf16[1024,88], index: 2, kind: input, shape index: {}]
  %s3 = inlined_call_operand.vmem [shape: bf16[1024,88], index: 3, kind: input, shape index: {}]
  %s4 = inlined_call_operand.vmem [shape: f32[1,98], index: 4, kind: input, shape index: {}]
  %s5 = inlined_call_operand.vmem [shape: f32[44,10], index: 5, kind: input, shape index: {}]
  %s6 = inlined_call_operand.vmem [shape: f32[2,44], index: 6, kind: input, shape index: {}]
  %s7 = inlined_call_operand.hbm [shape: f32[2,10], index: 7, kind: output, shape index: {}]
  %s8 = sld [smem:[#allocation0]]
  $region38: #{tpu_custom_call.1} parent=0
    _
  %s10 = ssub.s32 1, %s8
  %s11 = scalar_select 0, %s10, %s8
  $region1: #{tpu_custom_call.1} parent=0
    #allocation2 [shape = 'u8[1024]{0}', space=vmem, size = 0x400, scoped, tag = 'output window, operand 0, single buffered']
    #allocation3 [shape = 's32[1]{0}', space=sflag, size = 0x4, scoped, tag = 'scoped memory for tpu_custom_call.1']
    %12 = vsyncpa [#allocation3], 0
    // Predicated region
    $region2: #{tpu_custom_call.1} parent=1 // pred_check
      _
    $region3: #{tpu_custom_call.1} parent=1 // pred_check_branch
      %14 = sbr.rel (0) target = $region5
    $region4: #{tpu_custom_call.1} parent=1 // pred_region
      _
    $region5: #{tpu_custom_call.1} parent=1 // pred_fallthru
      _
    // Predicated region
    $region6: #{tpu_custom_call.1} parent=1 // pred_check
      _
    $region7: #{tpu_custom_call.1} parent=1 // pred_check_branch
      %16 = sbr.rel (0) target = $region9
    $region8: #{tpu_custom_call.1} parent=1 // pred_region
      _
    $region9: #{tpu_custom_call.1} parent=1 // pred_fallthru
      _
    // Predicated region
    $region10: #{tpu_custom_call.1} parent=1 // pred_check
      _
    $region11: #{tpu_custom_call.1} parent=1 // pred_check_branch
      %18 = sbr.rel (0) target = $region13
    $region12: #{tpu_custom_call.1} parent=1 // pred_region
      _
    $region13: #{tpu_custom_call.1} parent=1 // pred_fallthru
      _
    // Predicated region
    $region14: #{tpu_custom_call.1} parent=1 // pred_check
      _
    $region15: #{tpu_custom_call.1} parent=1 // pred_check_branch
      %20 = sbr.rel (0) target = $region17
    $region16: #{tpu_custom_call.1} parent=1 // pred_region
      _
    $region17: #{tpu_custom_call.1} parent=1 // pred_fallthru
      _
    // Predicated region
    $region18: #{tpu_custom_call.1} parent=1 // pred_check
      _
    $region19: #{tpu_custom_call.1} parent=1 // pred_check_branch
      %22 = sbr.rel (0) target = $region21
    $region20: #{tpu_custom_call.1} parent=1 // pred_region
      _
    $region21: #{tpu_custom_call.1} parent=1 // pred_fallthru
      _
    // Predicated region
    $region22: #{tpu_custom_call.1} parent=1 // pred_check
      _
    $region23: #{tpu_custom_call.1} parent=1 // pred_check_branch
      %24 = sbr.rel (0) target = $region25
    $region24: #{tpu_custom_call.1} parent=1 // pred_region
      _
    $region25: #{tpu_custom_call.1} parent=1 // pred_fallthru
      _
    // Predicated region
    $region26: #{tpu_custom_call.1} parent=1 // pred_check
      _
    $region27: #{tpu_custom_call.1} parent=1 // pred_check_branch
      %26 = sbr.rel (0) target = $region29
    $region28: #{tpu_custom_call.1} parent=1 // pred_region
      _
    $region29: #{tpu_custom_call.1} parent=1 // pred_fallthru
      _
    %v28 = vld [vmem:[%s0] sm:$0xff]
    %v29 = vld [vmem:[%s2] sm:$0xf]
    %v30 = vld [vmem:[%s2 + $0x4] sm:$0xf]
    %v31 = vld [vmem:[%s2 + $0x8] sm:$0xf]
    %v32 = vld [vmem:[%s2 + $0xc] sm:$0xf]
    %v33 = vld [vmem:[%s2 + $0x10] sm:$0xf]
    %v34 = vld [vmem:[%s2 + $0x14] sm:$0xf]
    %v35 = vld [vmem:[%s2 + $0x18] sm:$0xf]
    %v36 = vld [vmem:[%s2 + $0x1c] sm:$0xf]
    %v37 = vld [vmem:[%s2 + $0x20] sm:$0xf]
    %v38 = vld [vmem:[%s2 + $0x24] sm:$0xf]
    %v39 = vld [vmem:[%s2 + $0x28] sm:$0xf]
    %v40 = vld [vmem:[%s2 + $0x2c] sm:$0xf]
    %v41 = vld [vmem:[%s2 + $0x30] sm:$0xf]
    %v42 = vld [vmem:[%s2 + $0x34] sm:$0xf]
    %v43 = vld [vmem:[%s2 + $0x38] sm:$0xf]
    %v44 = vld [vmem:[%s2 + $0x3c] sm:$0xf]
    %v45 = vld [vmem:[%s2 + $0x40] sm:$0xf]
    %v46 = vld [vmem:[%s2 + $0x44] sm:$0xf]
    %v47 = vld [vmem:[%s2 + $0x48] sm:$0xf]
    %v48 = vld [vmem:[%s2 + $0x4c] sm:$0xf]
    %v49 = vld [vmem:[%s2 + $0x50] sm:$0xf]
    %v50 = vld [vmem:[%s2 + $0x54] sm:$0xf]
    %v51 = vld [vmem:[%s2 + $0x58] sm:$0xf]
    %v52 = vld [vmem:[%s2 + $0x5c] sm:$0xf]
    %v53 = vld [vmem:[%s2 + $0x60] sm:$0xf]
    %v54 = vld [vmem:[%s2 + $0x64] sm:$0xf]
    %v55 = vld [vmem:[%s2 + $0x68] sm:$0xf]
    %v56 = vld [vmem:[%s2 + $0x6c] sm:$0xf]
    %v57 = vld [vmem:[%s2 + $0x70] sm:$0xf]
    %v58 = vld [vmem:[%s2 + $0x74] sm:$0xf]
    %v59 = vld [vmem:[%s2 + $0x78] sm:$0xf]
    %v60 = vld [vmem:[%s2 + $0x7c] sm:$0xf]
    %v61 = vld [vmem:[%s2 + $0x80] sm:$0xf]
    %v62 = vld [vmem:[%s2 + $0x84] sm:$0xf]
    %v63 = vld [vmem:[%s2 + $0x88] sm:$0xf]
    %v64 = vld [vmem:[%s2 + $0x8c] sm:$0xf]
    %v65 = vld [vmem:[%s2 + $0x90] sm:$0xf]
    %v66 = vld [vmem:[%s2 + $0x94] sm:$0xf]
    %v67 = vld [vmem:[%s2 + $0x98] sm:$0xf]
    %v68 = vld [vmem:[%s2 + $0x9c] sm:$0xf]
    %v69 = vld [vmem:[%s2 + $0xa0] sm:$0xf]
    %v70 = vld [vmem:[%s2 + $0xa4] sm:$0xf]
    %v71 = vld [vmem:[%s2 + $0xa8] sm:$0xf]
    %v72 = vld [vmem:[%s2 + $0xac] sm:$0xf]
    %v73 = vld [vmem:[%s2 + $0xb0] sm:$0xf]
    %v74 = vld [vmem:[%s2 + $0xb4] sm:$0xf]
    %v75 = vld [vmem:[%s2 + $0xb8] sm:$0xf]
    %v76 = vld [vmem:[%s2 + $0xbc] sm:$0xf]
    %v77 = vld [vmem:[%s2 + $0xc0] sm:$0xf]
    %v78 = vld [vmem:[%s2 + $0xc4] sm:$0xf]
    %v79 = vld [vmem:[%s2 + $0xc8] sm:$0xf]
    %v80 = vld [vmem:[%s2 + $0xcc] sm:$0xf]
    %v81 = vld [vmem:[%s2 + $0xd0] sm:$0xf]
    %v82 = vld [vmem:[%s2 + $0xd4] sm:$0xf]
    %v83 = vld [vmem:[%s2 + $0xd8] sm:$0xf]
    %v84 = vld [vmem:[%s2 + $0xdc] sm:$0xf]
    %v85 = vld [vmem:[%s2 + $0xe0] sm:$0xf]
    %v86 = vld [vmem:[%s2 + $0xe4] sm:$0xf]
    %v87 = vld [vmem:[%s2 + $0xe8] sm:$0xf]
    %v88 = vld [vmem:[%s2 + $0xec] sm:$0xf]
    %v89 = vld [vmem:[%s2 + $0xf0] sm:$0xf]
    %v90 = vld [vmem:[%s2 + $0xf4] sm:$0xf]
    %v91 = vld [vmem:[%s2 + $0xf8] sm:$0xf]
    %v92 = vld [vmem:[%s2 + $0xfc] sm:$0xf]
    %v93 = vld [vmem:[%s2 + $0x100] sm:$0xf]
    %v94 = vld [vmem:[%s2 + $0x104] sm:$0xf]
    %v95 = vld [vmem:[%s2 + $0x108] sm:$0xf]
    %v96 = vld [vmem:[%s2 + $0x10c] sm:$0xf]
    %v97 = vld [vmem:[%s2 + $0x110] sm:$0xf]
    %v98 = vld [vmem:[%s2 + $0x114] sm:$0xf]
    %v99 = vld [vmem:[%s2 + $0x118] sm:$0xf]
    %v100 = vld [vmem:[%s2 + $0x11c] sm:$0xf]
    %v101 = vld [vmem:[%s2 + $0x120] sm:$0xf]
    %v102 = vld [vmem:[%s2 + $0x124] sm:$0xf]
    %v103 = vld [vmem:[%s2 + $0x128] sm:$0xf]
    %v104 = vld [vmem:[%s2 + $0x12c] sm:$0xf]
    %v105 = vld [vmem:[%s2 + $0x130] sm:$0xf]
    %v106 = vld [vmem:[%s2 + $0x134] sm:$0xf]
    %v107 = vld [vmem:[%s2 + $0x138] sm:$0xf]
    %v108 = vld [vmem:[%s2 + $0x13c] sm:$0xf]
    %v109 = vld [vmem:[%s2 + $0x140] sm:$0xf]
    %v110 = vld [vmem:[%s2 + $0x144] sm:$0xf]
    %v111 = vld [vmem:[%s2 + $0x148] sm:$0xf]
    %v112 = vld [vmem:[%s2 + $0x14c] sm:$0xf]
    %v113 = vld [vmem:[%s2 + $0x150] sm:$0xf]
    %v114 = vld [vmem:[%s2 + $0x154] sm:$0xf]
    %v115 = vld [vmem:[%s2 + $0x158] sm:$0xf]
    %v116 = vld [vmem:[%s2 + $0x15c] sm:$0xf]
    %v117 = vld [vmem:[%s2 + $0x160] sm:$0xf]
    %v118 = vld [vmem:[%s2 + $0x164] sm:$0xf]
    %v119 = vld [vmem:[%s2 + $0x168] sm:$0xf]
    %v120 = vld [vmem:[%s2 + $0x16c] sm:$0xf]
    %v121 = vld [vmem:[%s2 + $0x170] sm:$0xf]
    %v122 = vld [vmem:[%s2 + $0x174] sm:$0xf]
    %v123 = vld [vmem:[%s2 + $0x178] sm:$0xf]
    %v124 = vld [vmem:[%s2 + $0x17c] sm:$0xf]
    %v125 = vld [vmem:[%s2 + $0x180] sm:$0xf]
    %v126 = vld [vmem:[%s2 + $0x184] sm:$0xf]
    %v127 = vld [vmem:[%s2 + $0x188] sm:$0xf]
    %v128 = vld [vmem:[%s2 + $0x18c] sm:$0xf]
    %v129 = vld [vmem:[%s2 + $0x190] sm:$0xf]
    %v130 = vld [vmem:[%s2 + $0x194] sm:$0xf]
    %v131 = vld [vmem:[%s2 + $0x198] sm:$0xf]
    %v132 = vld [vmem:[%s2 + $0x19c] sm:$0xf]
    %v133 = vld [vmem:[%s2 + $0x1a0] sm:$0xf]
    %v134 = vld [vmem:[%s2 + $0x1a4] sm:$0xf]
    %v135 = vld [vmem:[%s2 + $0x1a8] sm:$0xf]
    %v136 = vld [vmem:[%s2 + $0x1ac] sm:$0xf]
    %v137 = vld [vmem:[%s2 + $0x1b0] sm:$0xf]
    %v138 = vld [vmem:[%s2 + $0x1b4] sm:$0xf]
    %v139 = vld [vmem:[%s2 + $0x1b8] sm:$0xf]
    %v140 = vld [vmem:[%s2 + $0x1bc] sm:$0xf]
    %v141 = vld [vmem:[%s2 + $0x1c0] sm:$0xf]
    %v142 = vld [vmem:[%s2 + $0x1c4] sm:$0xf]
    %v143 = vld [vmem:[%s2 + $0x1c8] sm:$0xf]
    %v144 = vld [vmem:[%s2 + $0x1cc] sm:$0xf]
    %v145 = vld [vmem:[%s2 + $0x1d0] sm:$0xf]
    %v146 = vld [vmem:[%s2 + $0x1d4] sm:$0xf]
    %v147 = vld [vmem:[%s2 + $0x1d8] sm:$0xf]
    %v148 = vld [vmem:[%s2 + $0x1dc] sm:$0xf]
    %v149 = vld [vmem:[%s2 + $0x1e0] sm:$0xf]
    %v150 = vld [vmem:[%s2 + $0x1e4] sm:$0xf]
    %v151 = vld [vmem:[%s2 + $0x1e8] sm:$0xf]
    %v152 = vld [vmem:[%s2 + $0x1ec] sm:$0xf]
    %v153 = vld [vmem:[%s2 + $0x1f0] sm:$0xf]
    %v154 = vld [vmem:[%s2 + $0x1f4] sm:$0xf]
    %v155 = vld [vmem:[%s2 + $0x1f8] sm:$0xf]
    %v156 = vld [vmem:[%s2 + $0x1fc] sm:$0xf]
    %v157 = vld [vmem:[%s1] sm:$0xff]
    %v158 = vld [vmem:[%s3] sm:$0xf]
    %v159 = vld [vmem:[%s3 + $0x4] sm:$0xf]
    %v160 = vld [vmem:[%s3 + $0x8] sm:$0xf]
    %v161 = vld [vmem:[%s3 + $0xc] sm:$0xf]
    %v162 = vld [vmem:[%s3 + $0x10] sm:$0xf]
    %v163 = vld [vmem:[%s3 + $0x14] sm:$0xf]
    %v164 = vld [vmem:[%s3 + $0x18] sm:$0xf]
    %v165 = vld [vmem:[%s3 + $0x1c] sm:$0xf]
    %v166 = vld [vmem:[%s3 + $0x20] sm:$0xf]
    %v167 = vld [vmem:[%s3 + $0x24] sm:$0xf]
    %v168 = vld [vmem:[%s3 + $0x28] sm:$0xf]
    %v169 = vld [vmem:[%s3 + $0x2c] sm:$0xf]
    %v170 = vld [vmem:[%s3 + $0x30] sm:$0xf]
    %v171 = vld [vmem:[%s3 + $0x34] sm:$0xf]
    %v172 = vld [vmem:[%s3 + $0x38] sm:$0xf]
    %v173 = vld [vmem:[%s3 + $0x3c] sm:$0xf]
    %v174 = vld [vmem:[%s3 + $0x40] sm:$0xf]
    %v175 = vld [vmem:[%s3 + $0x44] sm:$0xf]
    %v176 = vld [vmem:[%s3 + $0x48] sm:$0xf]
    %v177 = vld [vmem:[%s3 + $0x4c] sm:$0xf]
    %v178 = vld [vmem:[%s3 + $0x50] sm:$0xf]
    %v179 = vld [vmem:[%s3 + $0x54] sm:$0xf]
    %v180 = vld [vmem:[%s3 + $0x58] sm:$0xf]
    %v181 = vld [vmem:[%s3 + $0x5c] sm:$0xf]
    %v182 = vld [vmem:[%s3 + $0x60] sm:$0xf]
    %v183 = vld [vmem:[%s3 + $0x64] sm:$0xf]
    %v184 = vld [vmem:[%s3 + $0x68] sm:$0xf]
    %v185 = vld [vmem:[%s3 + $0x6c] sm:$0xf]
    %v186 = vld [vmem:[%s3 + $0x70] sm:$0xf]
    %v187 = vld [vmem:[%s3 + $0x74] sm:$0xf]
    %v188 = vld [vmem:[%s3 + $0x78] sm:$0xf]
    %v189 = vld [vmem:[%s3 + $0x7c] sm:$0xf]
    %v190 = vld [vmem:[%s3 + $0x80] sm:$0xf]
    %v191 = vld [vmem:[%s3 + $0x84] sm:$0xf]
    %v192 = vld [vmem:[%s3 + $0x88] sm:$0xf]
    %v193 = vld [vmem:[%s3 + $0x8c] sm:$0xf]
    %v194 = vld [vmem:[%s3 + $0x90] sm:$0xf]
    %v195 = vld [vmem:[%s3 + $0x94] sm:$0xf]
    %v196 = vld [vmem:[%s3 + $0x98] sm:$0xf]
    %v197 = vld [vmem:[%s3 + $0x9c] sm:$0xf]
    %v198 = vld [vmem:[%s3 + $0xa0] sm:$0xf]
    %v199 = vld [vmem:[%s3 + $0xa4] sm:$0xf]
    %v200 = vld [vmem:[%s3 + $0xa8] sm:$0xf]
    %v201 = vld [vmem:[%s3 + $0xac] sm:$0xf]
    %v202 = vld [vmem:[%s3 + $0xb0] sm:$0xf]
    %v203 = vld [vmem:[%s3 + $0xb4] sm:$0xf]
    %v204 = vld [vmem:[%s3 + $0xb8] sm:$0xf]
    %v205 = vld [vmem:[%s3 + $0xbc] sm:$0xf]
    %v206 = vld [vmem:[%s3 + $0xc0] sm:$0xf]
    %v207 = vld [vmem:[%s3 + $0xc4] sm:$0xf]
    %v208 = vld [vmem:[%s3 + $0xc8] sm:$0xf]
    %v209 = vld [vmem:[%s3 + $0xcc] sm:$0xf]
    %v210 = vld [vmem:[%s3 + $0xd0] sm:$0xf]
    %v211 = vld [vmem:[%s3 + $0xd4] sm:$0xf]
    %v212 = vld [vmem:[%s3 + $0xd8] sm:$0xf]
    %v213 = vld [vmem:[%s3 + $0xdc] sm:$0xf]
    %v214 = vld [vmem:[%s3 + $0xe0] sm:$0xf]
    %v215 = vld [vmem:[%s3 + $0xe4] sm:$0xf]
    %v216 = vld [vmem:[%s3 + $0xe8] sm:$0xf]
    %v217 = vld [vmem:[%s3 + $0xec] sm:$0xf]
    %v218 = vld [vmem:[%s3 + $0xf0] sm:$0xf]
    %v219 = vld [vmem:[%s3 + $0xf4] sm:$0xf]
    %v220 = vld [vmem:[%s3 + $0xf8] sm:$0xf]
    %v221 = vld [vmem:[%s3 + $0xfc] sm:$0xf]
    %v222 = vld [vmem:[%s3 + $0x100] sm:$0xf]
    %v223 = vld [vmem:[%s3 + $0x104] sm:$0xf]
    %v224 = vld [vmem:[%s3 + $0x108] sm:$0xf]
    %v225 = vld [vmem:[%s3 + $0x10c] sm:$0xf]
    %v226 = vld [vmem:[%s3 + $0x110] sm:$0xf]
    %v227 = vld [vmem:[%s3 + $0x114] sm:$0xf]
    %v228 = vld [vmem:[%s3 + $0x118] sm:$0xf]
    %v229 = vld [vmem:[%s3 + $0x11c] sm:$0xf]
    %v230 = vld [vmem:[%s3 + $0x120] sm:$0xf]
    %v231 = vld [vmem:[%s3 + $0x124] sm:$0xf]
    %v232 = vld [vmem:[%s3 + $0x128] sm:$0xf]
    %v233 = vld [vmem:[%s3 + $0x12c] sm:$0xf]
    %v234 = vld [vmem:[%s3 + $0x130] sm:$0xf]
    %v235 = vld [vmem:[%s3 + $0x134] sm:$0xf]
    %v236 = vld [vmem:[%s3 + $0x138] sm:$0xf]
    %v237 = vld [vmem:[%s3 + $0x13c] sm:$0xf]
    %v238 = vld [vmem:[%s3 + $0x140] sm:$0xf]
    %v239 = vld [vmem:[%s3 + $0x144] sm:$0xf]
    %v240 = vld [vmem:[%s3 + $0x148] sm:$0xf]
    %v241 = vld [vmem:[%s3 + $0x14c] sm:$0xf]
    %v242 = vld [vmem:[%s3 + $0x150] sm:$0xf]
    %v243 = vld [vmem:[%s3 + $0x154] sm:$0xf]
    %v244 = vld [vmem:[%s3 + $0x158] sm:$0xf]
    %v245 = vld [vmem:[%s3 + $0x15c] sm:$0xf]
    %v246 = vld [vmem:[%s3 + $0x160] sm:$0xf]
    %v247 = vld [vmem:[%s3 + $0x164] sm:$0xf]
    %v248 = vld [vmem:[%s3 + $0x168] sm:$0xf]
    %v249 = vld [vmem:[%s3 + $0x16c] sm:$0xf]
    %v250 = vld [vmem:[%s3 + $0x170] sm:$0xf]
    %v251 = vld [vmem:[%s3 + $0x174] sm:$0xf]
    %v252 = vld [vmem:[%s3 + $0x178] sm:$0xf]
    %v253 = vld [vmem:[%s3 + $0x17c] sm:$0xf]
    %v254 = vld [vmem:[%s3 + $0x180] sm:$0xf]
    %v255 = vld [vmem:[%s3 + $0x184] sm:$0xf]
    %v256 = vld [vmem:[%s3 + $0x188] sm:$0xf]
    %v257 = vld [vmem:[%s3 + $0x18c] sm:$0xf]
    %v258 = vld [vmem:[%s3 + $0x190] sm:$0xf]
    %v259 = vld [vmem:[%s3 + $0x194] sm:$0xf]
    %v260 = vld [vmem:[%s3 + $0x198] sm:$0xf]
    %v261 = vld [vmem:[%s3 + $0x19c] sm:$0xf]
    %v262 = vld [vmem:[%s3 + $0x1a0] sm:$0xf]
    %v263 = vld [vmem:[%s3 + $0x1a4] sm:$0xf]
    %v264 = vld [vmem:[%s3 + $0x1a8] sm:$0xf]
    %v265 = vld [vmem:[%s3 + $0x1ac] sm:$0xf]
    %v266 = vld [vmem:[%s3 + $0x1b0] sm:$0xf]
    %v267 = vld [vmem:[%s3 + $0x1b4] sm:$0xf]
    %v268 = vld [vmem:[%s3 + $0x1b8] sm:$0xf]
    %v269 = vld [vmem:[%s3 + $0x1bc] sm:$0xf]
    %v270 = vld [vmem:[%s3 + $0x1c0] sm:$0xf]
    %v271 = vld [vmem:[%s3 + $0x1c4] sm:$0xf]
    %v272 = vld [vmem:[%s3 + $0x1c8] sm:$0xf]
    %v273 = vld [vmem:[%s3 + $0x1cc] sm:$0xf]
    %v274 = vld [vmem:[%s3 + $0x1d0] sm:$0xf]
    %v275 = vld [vmem:[%s3 + $0x1d4] sm:$0xf]
    %v276 = vld [vmem:[%s3 + $0x1d8] sm:$0xf]
    %v277 = vld [vmem:[%s3 + $0x1dc] sm:$0xf]
    %v278 = vld [vmem:[%s3 + $0x1e0] sm:$0xf]
    %v279 = vld [vmem:[%s3 + $0x1e4] sm:$0xf]
    %v280 = vld [vmem:[%s3 + $0x1e8] sm:$0xf]
    %v281 = vld [vmem:[%s3 + $0x1ec] sm:$0xf]
    %v282 = vld [vmem:[%s3 + $0x1f0] sm:$0xf]
    %v283 = vld [vmem:[%s3 + $0x1f4] sm:$0xf]
    %v284 = vld [vmem:[%s3 + $0x1f8] sm:$0xf]
    %v285 = vld [vmem:[%s3 + $0x1fc] sm:$0xf]
    %v287 = vcombine.high %v157, %v157
    %v289 = vunpack.c.l.s4 1966171168
    %v290 = vunpack.c.0.s8 %v289
    %v291 = vlaneseq
    %v292 = vshrl.u32 %v291, 7
    %v293 = vsub.s32 %v290, %v292
    %v294 = vrot.slane %v157, %v293
    %v296 = vunpack.c.l.s4 1966171168
    %v297 = vunpack.c.0.s8 %v296
    %v298 = vlaneseq
    %v299 = vshrl.u32 %v298, 7
    %v300 = vsub.s32 %v297, %v299
    %v301 = vrot.slane %v287, %v300
    %v302 = vcombine.high %v294, %v294
    %v303 = vcombine.high %v301, %v301
    %v305 = vunpack.c.l.s4 1966171168
    %v306 = vunpack.c.0.s8 %v305
    %v307 = vlaneseq
    %v308 = vshrl.u32 %v307, 7
    %v309 = vsub.s32 %v306, %v308
    %v310 = vrot.slane %v294, %v309
    %v312 = vunpack.c.l.s4 1966171168
    %v313 = vunpack.c.0.s8 %v312
    %v314 = vlaneseq
    %v315 = vshrl.u32 %v314, 7
    %v316 = vsub.s32 %v313, %v315
    %v317 = vrot.slane %v301, %v316
    %v319 = vunpack.c.l.s4 1966171168
    %v320 = vunpack.c.0.s8 %v319
    %v321 = vlaneseq
    %v322 = vshrl.u32 %v321, 7
    %v323 = vsub.s32 %v320, %v322
    %v324 = vrot.slane %v302, %v323
    %v326 = vunpack.c.l.s4 1966171168
    %v327 = vunpack.c.0.s8 %v326
    %v328 = vlaneseq
    %v329 = vshrl.u32 %v328, 7
    %v330 = vsub.s32 %v327, %v329
    %v331 = vrot.slane %v303, %v330
    %v332 = vcombine.high %v310, %v310
    %v333 = vcombine.high %v317, %v317
    %v334 = vcombine.high %v324, %v324
    %v335 = vcombine.high %v331, %v331
    %v472 = vunpack.c.l.b16 %v158
    %v473 = vunpack.c.l.b16 %v159
    %v474 = vunpack.c.l.b16 %v160
    %v475 = vunpack.c.l.b16 %v161
    %v476 = vunpack.c.l.b16 %v162
    %v477 = vunpack.c.l.b16 %v163
    %v478 = vunpack.c.l.b16 %v164
    %v479 = vunpack.c.l.b16 %v165
    %v480 = vunpack.c.l.b16 %v166
    %v481 = vunpack.c.l.b16 %v167
    %v482 = vunpack.c.l.b16 %v168
    %v483 = vunpack.c.l.b16 %v169
    %v484 = vunpack.c.l.b16 %v170
    %v485 = vunpack.c.l.b16 %v171
    %v486 = vunpack.c.l.b16 %v172
    %v487 = vunpack.c.l.b16 %v173
    %v488 = vunpack.c.l.b16 %v174
    %v489 = vunpack.c.l.b16 %v175
    %v490 = vunpack.c.l.b16 %v176
    %v491 = vunpack.c.l.b16 %v177
    %v492 = vunpack.c.l.b16 %v178
    %v493 = vunpack.c.l.b16 %v179
    %v494 = vunpack.c.l.b16 %v180
    %v495 = vunpack.c.l.b16 %v181
    %v496 = vunpack.c.l.b16 %v182
    %v497 = vunpack.c.l.b16 %v183
    %v498 = vunpack.c.l.b16 %v184
    %v499 = vunpack.c.l.b16 %v185
    %v500 = vunpack.c.l.b16 %v186
    %v501 = vunpack.c.l.b16 %v187
    %v502 = vunpack.c.l.b16 %v188
    %v503 = vunpack.c.l.b16 %v189
    %v504 = vunpack.c.l.b16 %v190
    %v505 = vunpack.c.l.b16 %v191
    %v506 = vunpack.c.l.b16 %v192
    %v507 = vunpack.c.l.b16 %v193
    %v508 = vunpack.c.l.b16 %v194
    %v509 = vunpack.c.l.b16 %v195
    %v510 = vunpack.c.l.b16 %v196
    %v511 = vunpack.c.l.b16 %v197
    %v512 = vunpack.c.l.b16 %v198
    %v513 = vunpack.c.l.b16 %v199
    %v514 = vunpack.c.l.b16 %v200
    %v515 = vunpack.c.l.b16 %v201
    %v516 = vunpack.c.l.b16 %v202
    %v517 = vunpack.c.l.b16 %v203
    %v518 = vunpack.c.l.b16 %v204
    %v519 = vunpack.c.l.b16 %v205
    %v520 = vunpack.c.l.b16 %v206
    %v521 = vunpack.c.l.b16 %v207
    %v522 = vunpack.c.l.b16 %v208
    %v523 = vunpack.c.l.b16 %v209
    %v524 = vunpack.c.l.b16 %v210
    %v525 = vunpack.c.l.b16 %v211
    %v526 = vunpack.c.l.b16 %v212
    %v527 = vunpack.c.l.b16 %v213
    %v528 = vunpack.c.l.b16 %v214
    %v529 = vunpack.c.l.b16 %v215
    %v530 = vunpack.c.l.b16 %v216
    %v531 = vunpack.c.l.b16 %v217
    %v532 = vunpack.c.l.b16 %v218
    %v533 = vunpack.c.l.b16 %v219
    %v534 = vunpack.c.l.b16 %v220
    %v535 = vunpack.c.l.b16 %v221
    %v536 = vunpack.c.l.b16 %v222
    %v537 = vunpack.c.l.b16 %v223
    %v538 = vunpack.c.l.b16 %v224
    %v539 = vunpack.c.l.b16 %v225
    %v540 = vunpack.c.l.b16 %v226
    %v541 = vunpack.c.l.b16 %v227
    %v542 = vunpack.c.l.b16 %v228
    %v543 = vunpack.c.l.b16 %v229
    %v544 = vunpack.c.l.b16 %v230
    %v545 = vunpack.c.l.b16 %v231
    %v546 = vunpack.c.l.b16 %v232
    %v547 = vunpack.c.l.b16 %v233
    %v548 = vunpack.c.l.b16 %v234
    %v549 = vunpack.c.l.b16 %v235
    %v550 = vunpack.c.l.b16 %v236
    %v551 = vunpack.c.l.b16 %v237
    %v552 = vunpack.c.l.b16 %v238
    %v553 = vunpack.c.l.b16 %v239
    %v554 = vunpack.c.l.b16 %v240
    %v555 = vunpack.c.l.b16 %v241
    %v556 = vunpack.c.l.b16 %v242
    %v557 = vunpack.c.l.b16 %v243
    %v558 = vunpack.c.l.b16 %v244
    %v559 = vunpack.c.l.b16 %v245
    %v560 = vunpack.c.l.b16 %v246
    %v561 = vunpack.c.l.b16 %v247
    %v562 = vunpack.c.l.b16 %v248
    %v563 = vunpack.c.l.b16 %v249
    %v564 = vunpack.c.l.b16 %v250
    %v565 = vunpack.c.l.b16 %v251
    %v566 = vunpack.c.l.b16 %v252
    %v567 = vunpack.c.l.b16 %v253
    %v568 = vunpack.c.l.b16 %v254
    %v569 = vunpack.c.l.b16 %v255
    %v570 = vunpack.c.l.b16 %v256
    %v571 = vunpack.c.l.b16 %v257
    %v572 = vunpack.c.l.b16 %v258
    %v573 = vunpack.c.l.b16 %v259
    %v574 = vunpack.c.l.b16 %v260
    %v575 = vunpack.c.l.b16 %v261
    %v576 = vunpack.c.l.b16 %v262
    %v577 = vunpack.c.l.b16 %v263
    %v578 = vunpack.c.l.b16 %v264
    %v579 = vunpack.c.l.b16 %v265
    %v580 = vunpack.c.l.b16 %v266
    %v581 = vunpack.c.l.b16 %v267
    %v582 = vunpack.c.l.b16 %v268
    %v583 = vunpack.c.l.b16 %v269
    %v584 = vunpack.c.l.b16 %v270
    %v585 = vunpack.c.l.b16 %v271
    %v586 = vunpack.c.l.b16 %v272
    %v587 = vunpack.c.l.b16 %v273
    %v588 = vunpack.c.l.b16 %v274
    %v589 = vunpack.c.l.b16 %v275
    %v590 = vunpack.c.l.b16 %v276
    %v591 = vunpack.c.l.b16 %v277
    %v592 = vunpack.c.l.b16 %v278
    %v593 = vunpack.c.l.b16 %v279
    %v594 = vunpack.c.l.b16 %v280
    %v595 = vunpack.c.l.b16 %v281
    %v596 = vunpack.c.l.b16 %v282
    %v597 = vunpack.c.l.b16 %v283
    %v598 = vunpack.c.l.b16 %v284
    %v599 = vunpack.c.l.b16 %v285
    %v600 = vpack.c.b16 %v473, %v472
    %v601 = vpack.c.b16 %v475, %v474
    %v602 = vpack.c.b16 %v477, %v476
    %v603 = vpack.c.b16 %v479, %v478
    %v604 = vpack.c.b16 %v481, %v480
    %v605 = vpack.c.b16 %v483, %v482
    %v606 = vpack.c.b16 %v485, %v484
    %v607 = vpack.c.b16 %v487, %v486
    %v608 = vpack.c.b16 %v489, %v488
    %v609 = vpack.c.b16 %v491, %v490
    %v610 = vpack.c.b16 %v493, %v492
    %v611 = vpack.c.b16 %v495, %v494
    %v612 = vpack.c.b16 %v497, %v496
    %v613 = vpack.c.b16 %v499, %v498
    %v614 = vpack.c.b16 %v501, %v500
    %v615 = vpack.c.b16 %v503, %v502
    %v616 = vpack.c.b16 %v505, %v504
    %v617 = vpack.c.b16 %v507, %v506
    %v618 = vpack.c.b16 %v509, %v508
    %v619 = vpack.c.b16 %v511, %v510
    %v620 = vpack.c.b16 %v513, %v512
    %v621 = vpack.c.b16 %v515, %v514
    %v622 = vpack.c.b16 %v517, %v516
    %v623 = vpack.c.b16 %v519, %v518
    %v624 = vpack.c.b16 %v521, %v520
    %v625 = vpack.c.b16 %v523, %v522
    %v626 = vpack.c.b16 %v525, %v524
    %v627 = vpack.c.b16 %v527, %v526
    %v628 = vpack.c.b16 %v529, %v528
    %v629 = vpack.c.b16 %v531, %v530
    %v630 = vpack.c.b16 %v533, %v532
    %v631 = vpack.c.b16 %v535, %v534
    %v632 = vpack.c.b16 %v537, %v536
    %v633 = vpack.c.b16 %v539, %v538
    %v634 = vpack.c.b16 %v541, %v540
    %v635 = vpack.c.b16 %v543, %v542
    %v636 = vpack.c.b16 %v545, %v544
    %v637 = vpack.c.b16 %v547, %v546
    %v638 = vpack.c.b16 %v549, %v548
    %v639 = vpack.c.b16 %v551, %v550
    %v640 = vpack.c.b16 %v553, %v552
    %v641 = vpack.c.b16 %v555, %v554
    %v642 = vpack.c.b16 %v557, %v556
    %v643 = vpack.c.b16 %v559, %v558
    %v644 = vpack.c.b16 %v561, %v560
    %v645 = vpack.c.b16 %v563, %v562
    %v646 = vpack.c.b16 %v565, %v564
    %v647 = vpack.c.b16 %v567, %v566
    %v648 = vpack.c.b16 %v569, %v568
    %v649 = vpack.c.b16 %v571, %v570
    %v650 = vpack.c.b16 %v573, %v572
    %v651 = vpack.c.b16 %v575, %v574
    %v652 = vpack.c.b16 %v577, %v576
    %v653 = vpack.c.b16 %v579, %v578
    %v654 = vpack.c.b16 %v581, %v580
    %v655 = vpack.c.b16 %v583, %v582
    %v656 = vpack.c.b16 %v585, %v584
    %v657 = vpack.c.b16 %v587, %v586
    %v658 = vpack.c.b16 %v589, %v588
    %v659 = vpack.c.b16 %v591, %v590
    %v660 = vpack.c.b16 %v593, %v592
    %v661 = vpack.c.b16 %v595, %v594
    %v662 = vpack.c.b16 %v597, %v596
    %v663 = vpack.c.b16 %v599, %v598
    %728 = vmatprep.subr.bf16.mxu0 0
    %729 = vmatpush1.bf16.msra.mxu0 %v600
    %730 = vmatprep.subr.bf16.mxu0 0
    %731 = vmatpush1.bf16.msra.mxu0 %v601
    %732 = vmatprep.subr.bf16.mxu0 0
    %733 = vmatpush1.bf16.msra.mxu0 %v602
    %734 = vmatprep.subr.bf16.mxu0 0
    %735 = vmatpush1.bf16.msra.mxu0 %v603
    %736 = vmatprep.subr.bf16.mxu0 0
    %737 = vmatpush1.bf16.msra.mxu0 %v604
    %738 = vmatprep.subr.bf16.mxu0 0
    %739 = vmatpush1.bf16.msra.mxu0 %v605
    %740 = vmatprep.subr.bf16.mxu0 0
    %741 = vmatpush1.bf16.msra.mxu0 %v606
    %742 = vmatprep.subr.bf16.mxu0 0
    %743 = vmatpush1.bf16.msra.mxu0 %v607
    %744 = vmatprep.subr.bf16.mxu0 0
    %745 = vmatpush1.bf16.msra.mxu0 %v608
    %746 = vmatprep.subr.bf16.mxu0 0
    %747 = vmatpush1.bf16.msra.mxu0 %v609
    %748 = vmatprep.subr.bf16.mxu0 0
    %749 = vmatpush1.bf16.msra.mxu0 %v610
    %750 = vmatprep.subr.bf16.mxu0 0
    %751 = vmatpush1.bf16.msra.mxu0 %v611
    %752 = vmatprep.subr.bf16.mxu0 0
    %753 = vmatpush1.bf16.msra.mxu0 %v612
    %754 = vmatprep.subr.bf16.mxu0 0
    %755 = vmatpush1.bf16.msra.mxu0 %v613
    %756 = vmatprep.subr.bf16.mxu0 0
    %757 = vmatpush1.bf16.msra.mxu0 %v614
    %758 = vmatprep.subr.bf16.mxu0 0
    %759 = vmatpush1.bf16.msra.mxu0 %v615
    %760 = vmatprep.mubr.bf16.mxu0 %v324
    %761 = vmatmul.mubr.bf16.gmra.mrb[0].mxu0 %v310
    %v762 = vpop.f32.mrb[0].mxu0
    %v763 = vadd.f32 0.0, %v762
    %v764 = vpop.f32.mrb[0].mxu0
    %v765 = vpop.f32.mrb[0].mxu0
    %v766 = vpop.f32.mrb[0].mxu0
    %767 = vdwg.mxu0
    %768 = vmatprep.subr.bf16.mxu0 0
    %769 = vmatpush1.bf16.msra.mxu0 %v616
    %770 = vmatprep.subr.bf16.mxu0 0
    %771 = vmatpush1.bf16.msra.mxu0 %v617
    %772 = vmatprep.subr.bf16.mxu0 0
    %773 = vmatpush1.bf16.msra.mxu0 %v618
    %774 = vmatprep.subr.bf16.mxu0 0
    %775 = vmatpush1.bf16.msra.mxu0 %v619
    %776 = vmatprep.subr.bf16.mxu0 0
    %777 = vmatpush1.bf16.msra.mxu0 %v620
    %778 = vmatprep.subr.bf16.mxu0 0
    %779 = vmatpush1.bf16.msra.mxu0 %v621
    %780 = vmatprep.subr.bf16.mxu0 0
    %781 = vmatpush1.bf16.msra.mxu0 %v622
    %782 = vmatprep.subr.bf16.mxu0 0
    %783 = vmatpush1.bf16.msra.mxu0 %v623
    %784 = vmatprep.subr.bf16.mxu0 0
    %785 = vmatpush1.bf16.msra.mxu0 %v624
    %786 = vmatprep.subr.bf16.mxu0 0
    %787 = vmatpush1.bf16.msra.mxu0 %v625
    %788 = vmatprep.subr.bf16.mxu0 0
    %789 = vmatpush1.bf16.msra.mxu0 %v626
    %790 = vmatprep.subr.bf16.mxu0 0
    %791 = vmatpush1.bf16.msra.mxu0 %v627
    %792 = vmatprep.subr.bf16.mxu0 0
    %793 = vmatpush1.bf16.msra.mxu0 %v628
    %794 = vmatprep.subr.bf16.mxu0 0
    %795 = vmatpush1.bf16.msra.mxu0 %v629
    %796 = vmatprep.subr.bf16.mxu0 0
    %797 = vmatpush1.bf16.msra.mxu0 %v630
    %798 = vmatprep.subr.bf16.mxu0 0
    %799 = vmatpush1.bf16.msra.mxu0 %v631
    %800 = vmatprep.mubr.bf16.mxu0 %v334
    %801 = vmatmul.mubr.bf16.gmra.mrb[0].mxu0 %v332
    %v802 = vpop.f32.mrb[0].mxu0
    %v803 = vadd.f32 %v763, %v802
    %v804 = vpop.f32.mrb[0].mxu0
    %v805 = vpop.f32.mrb[0].mxu0
    %v806 = vpop.f32.mrb[0].mxu0
    %807 = vdwg.mxu0
    %808 = vmatprep.subr.bf16.mxu0 0
    %809 = vmatpush1.bf16.msra.mxu0 %v632
    %810 = vmatprep.subr.bf16.mxu0 0
    %811 = vmatpush1.bf16.msra.mxu0 %v633
    %812 = vmatprep.subr.bf16.mxu0 0
    %813 = vmatpush1.bf16.msra.mxu0 %v634
    %814 = vmatprep.subr.bf16.mxu0 0
    %815 = vmatpush1.bf16.msra.mxu0 %v635
    %816 = vmatprep.subr.bf16.mxu0 0
    %817 = vmatpush1.bf16.msra.mxu0 %v636
    %818 = vmatprep.subr.bf16.mxu0 0
    %819 = vmatpush1.bf16.msra.mxu0 %v637
    %820 = vmatprep.subr.bf16.mxu0 0
    %821 = vmatpush1.bf16.msra.mxu0 %v638
    %822 = vmatprep.subr.bf16.mxu0 0
    %823 = vmatpush1.bf16.msra.mxu0 %v639
    %824 = vmatprep.subr.bf16.mxu0 0
    %825 = vmatpush1.bf16.msra.mxu0 %v640
    %826 = vmatprep.subr.bf16.mxu0 0
    %827 = vmatpush1.bf16.msra.mxu0 %v641
    %828 = vmatprep.subr.bf16.mxu0 0
    %829 = vmatpush1.bf16.msra.mxu0 %v642
    %830 = vmatprep.subr.bf16.mxu0 0
    %831 = vmatpush1.bf16.msra.mxu0 %v643
    %832 = vmatprep.subr.bf16.mxu0 0
    %833 = vmatpush1.bf16.msra.mxu0 %v644
    %834 = vmatprep.subr.bf16.mxu0 0
    %835 = vmatpush1.bf16.msra.mxu0 %v645
    %836 = vmatprep.subr.bf16.mxu0 0
    %837 = vmatpush1.bf16.msra.mxu0 %v646
    %838 = vmatprep.subr.bf16.mxu0 0
    %839 = vmatpush1.bf16.msra.mxu0 %v647
    %840 = vmatprep.mubr.bf16.mxu0 %v331
    %841 = vmatmul.mubr.bf16.gmra.mrb[0].mxu0 %v317
    %v842 = vpop.f32.mrb[0].mxu0
    %v843 = vadd.f32 %v803, %v842
    %v844 = vpop.f32.mrb[0].mxu0
    %v845 = vpop.f32.mrb[0].mxu0
    %v846 = vpop.f32.mrb[0].mxu0
    %847 = vdwg.mxu0
    %848 = vmatprep.subr.bf16.mxu0 0
    %849 = vmatpush1.bf16.msra.mxu0 %v648
    %850 = vmatprep.subr.bf16.mxu0 0
    %851 = vmatpush1.bf16.msra.mxu0 %v649
    %852 = vmatprep.subr.bf16.mxu0 0
    %853 = vmatpush1.bf16.msra.mxu0 %v650
    %854 = vmatprep.subr.bf16.mxu0 0
    %855 = vmatpush1.bf16.msra.mxu0 %v651
    %856 = vmatprep.subr.bf16.mxu0 0
    %857 = vmatpush1.bf16.msra.mxu0 %v652
    %858 = vmatprep.subr.bf16.mxu0 0
    %859 = vmatpush1.bf16.msra.mxu0 %v653
    %860 = vmatprep.subr.bf16.mxu0 0
    %861 = vmatpush1.bf16.msra.mxu0 %v654
    %862 = vmatprep.subr.bf16.mxu0 0
    %863 = vmatpush1.bf16.msra.mxu0 %v655
    %864 = vmatprep.subr.bf16.mxu0 0
    %865 = vmatpush1.bf16.msra.mxu0 %v656
    %866 = vmatprep.subr.bf16.mxu0 0
    %867 = vmatpush1.bf16.msra.mxu0 %v657
    %868 = vmatprep.subr.bf16.mxu0 0
    %869 = vmatpush1.bf16.msra.mxu0 %v658
    %870 = vmatprep.subr.bf16.mxu0 0
    %871 = vmatpush1.bf16.msra.mxu0 %v659
    %872 = vmatprep.subr.bf16.mxu0 0
    %873 = vmatpush1.bf16.msra.mxu0 %v660
    %874 = vmatprep.subr.bf16.mxu0 0
    %875 = vmatpush1.bf16.msra.mxu0 %v661
    %876 = vmatprep.subr.bf16.mxu0 0
    %877 = vmatpush1.bf16.msra.mxu0 %v662
    %878 = vmatprep.subr.bf16.mxu0 0
    %879 = vmatpush1.bf16.msra.mxu0 %v663
    %880 = vmatprep.mubr.bf16.mxu0 %v335
    %881 = vmatmul.mubr.bf16.gmra.mrb[0].mxu0 %v333
    %v882 = vpop.f32.mrb[0].mxu0
    %v883 = vadd.f32 %v843, %v882
    %v884 = vpop.f32.mrb[0].mxu0
    %v885 = vpop.f32.mrb[0].mxu0
    %v886 = vpop.f32.mrb[0].mxu0
    %887 = vdwg.mxu0
    %v889 = vcombine.high %v28, %v28
    %v891 = vunpack.c.l.s4 1966171168
    %v892 = vunpack.c.0.s8 %v891
    %v893 = vlaneseq
    %v894 = vshrl.u32 %v893, 7
    %v895 = vsub.s32 %v892, %v894
    %v896 = vrot.slane %v28, %v895
    %v898 = vunpack.c.l.s4 1966171168
    %v899 = vunpack.c.0.s8 %v898
    %v900 = vlaneseq
    %v901 = vshrl.u32 %v900, 7
    %v902 = vsub.s32 %v899, %v901
    %v903 = vrot.slane %v889, %v902
    %v904 = vcombine.high %v896, %v896
    %v905 = vcombine.high %v903, %v903
    %v907 = vunpack.c.l.s4 1966171168
    %v908 = vunpack.c.0.s8 %v907
    %v909 = vlaneseq
    %v910 = vshrl.u32 %v909, 7
    %v911 = vsub.s32 %v908, %v910
    %v912 = vrot.slane %v896, %v911
    %v914 = vunpack.c.l.s4 1966171168
    %v915 = vunpack.c.0.s8 %v914
    %v916 = vlaneseq
    %v917 = vshrl.u32 %v916, 7
    %v918 = vsub.s32 %v915, %v917
    %v919 = vrot.slane %v903, %v918
    %v921 = vunpack.c.l.s4 1966171168
    %v922 = vunpack.c.0.s8 %v921
    %v923 = vlaneseq
    %v924 = vshrl.u32 %v923, 7
    %v925 = vsub.s32 %v922, %v924
    %v926 = vrot.slane %v904, %v925
    %v928 = vunpack.c.l.s4 1966171168
    %v929 = vunpack.c.0.s8 %v928
    %v930 = vlaneseq
    %v931 = vshrl.u32 %v930, 7
    %v932 = vsub.s32 %v929, %v931
    %v933 = vrot.slane %v905, %v932
    %v934 = vcombine.high %v912, %v912
    %v935 = vcombine.high %v919, %v919
    %v936 = vcombine.high %v926, %v926
    %v937 = vcombine.high %v933, %v933
    %v1074 = vunpack.c.l.b16 %v29
    %v1075 = vunpack.c.l.b16 %v30
    %v1076 = vunpack.c.l.b16 %v31
    %v1077 = vunpack.c.l.b16 %v32
    %v1078 = vunpack.c.l.b16 %v33
    %v1079 = vunpack.c.l.b16 %v34
    %v1080 = vunpack.c.l.b16 %v35
    %v1081 = vunpack.c.l.b16 %v36
    %v1082 = vunpack.c.l.b16 %v37
    %v1083 = vunpack.c.l.b16 %v38
    %v1084 = vunpack.c.l.b16 %v39
    %v1085 = vunpack.c.l.b16 %v40
    %v1086 = vunpack.c.l.b16 %v41
    %v1087 = vunpack.c.l.b16 %v42
    %v1088 = vunpack.c.l.b16 %v43
    %v1089 = vunpack.c.l.b16 %v44
    %v1090 = vunpack.c.l.b16 %v45
    %v1091 = vunpack.c.l.b16 %v46
    %v1092 = vunpack.c.l.b16 %v47
    %v1093 = vunpack.c.l.b16 %v48
    %v1094 = vunpack.c.l.b16 %v49
    %v1095 = vunpack.c.l.b16 %v50
    %v1096 = vunpack.c.l.b16 %v51
    %v1097 = vunpack.c.l.b16 %v52
    %v1098 = vunpack.c.l.b16 %v53
    %v1099 = vunpack.c.l.b16 %v54
    %v1100 = vunpack.c.l.b16 %v55
    %v1101 = vunpack.c.l.b16 %v56
    %v1102 = vunpack.c.l.b16 %v57
    %v1103 = vunpack.c.l.b16 %v58
    %v1104 = vunpack.c.l.b16 %v59
    %v1105 = vunpack.c.l.b16 %v60
    %v1106 = vunpack.c.l.b16 %v61
    %v1107 = vunpack.c.l.b16 %v62
    %v1108 = vunpack.c.l.b16 %v63
    %v1109 = vunpack.c.l.b16 %v64
    %v1110 = vunpack.c.l.b16 %v65
    %v1111 = vunpack.c.l.b16 %v66
    %v1112 = vunpack.c.l.b16 %v67
    %v1113 = vunpack.c.l.b16 %v68
    %v1114 = vunpack.c.l.b16 %v69
    %v1115 = vunpack.c.l.b16 %v70
    %v1116 = vunpack.c.l.b16 %v71
    %v1117 = vunpack.c.l.b16 %v72
    %v1118 = vunpack.c.l.b16 %v73
    %v1119 = vunpack.c.l.b16 %v74
    %v1120 = vunpack.c.l.b16 %v75
    %v1121 = vunpack.c.l.b16 %v76
    %v1122 = vunpack.c.l.b16 %v77
    %v1123 = vunpack.c.l.b16 %v78
    %v1124 = vunpack.c.l.b16 %v79
    %v1125 = vunpack.c.l.b16 %v80
    %v1126 = vunpack.c.l.b16 %v81
    %v1127 = vunpack.c.l.b16 %v82
    %v1128 = vunpack.c.l.b16 %v83
    %v1129 = vunpack.c.l.b16 %v84
    %v1130 = vunpack.c.l.b16 %v85
    %v1131 = vunpack.c.l.b16 %v86
    %v1132 = vunpack.c.l.b16 %v87
    %v1133 = vunpack.c.l.b16 %v88
    %v1134 = vunpack.c.l.b16 %v89
    %v1135 = vunpack.c.l.b16 %v90
    %v1136 = vunpack.c.l.b16 %v91
    %v1137 = vunpack.c.l.b16 %v92
    %v1138 = vunpack.c.l.b16 %v93
    %v1139 = vunpack.c.l.b16 %v94
    %v1140 = vunpack.c.l.b16 %v95
    %v1141 = vunpack.c.l.b16 %v96
    %v1142 = vunpack.c.l.b16 %v97
    %v1143 = vunpack.c.l.b16 %v98
    %v1144 = vunpack.c.l.b16 %v99
    %v1145 = vunpack.c.l.b16 %v100
    %v1146 = vunpack.c.l.b16 %v101
    %v1147 = vunpack.c.l.b16 %v102
    %v1148 = vunpack.c.l.b16 %v103
    %v1149 = vunpack.c.l.b16 %v104
    %v1150 = vunpack.c.l.b16 %v105
    %v1151 = vunpack.c.l.b16 %v106
    %v1152 = vunpack.c.l.b16 %v107
    %v1153 = vunpack.c.l.b16 %v108
    %v1154 = vunpack.c.l.b16 %v109
    %v1155 = vunpack.c.l.b16 %v110
    %v1156 = vunpack.c.l.b16 %v111
    %v1157 = vunpack.c.l.b16 %v112
    %v1158 = vunpack.c.l.b16 %v113
    %v1159 = vunpack.c.l.b16 %v114
    %v1160 = vunpack.c.l.b16 %v115
    %v1161 = vunpack.c.l.b16 %v116
    %v1162 = vunpack.c.l.b16 %v117
    %v1163 = vunpack.c.l.b16 %v118
    %v1164 = vunpack.c.l.b16 %v119
    %v1165 = vunpack.c.l.b16 %v120
    %v1166 = vunpack.c.l.b16 %v121
    %v1167 = vunpack.c.l.b16 %v122
    %v1168 = vunpack.c.l.b16 %v123
    %v1169 = vunpack.c.l.b16 %v124
    %v1170 = vunpack.c.l.b16 %v125
    %v1171 = vunpack.c.l.b16 %v126
    %v1172 = vunpack.c.l.b16 %v127
    %v1173 = vunpack.c.l.b16 %v128
    %v1174 = vunpack.c.l.b16 %v129
    %v1175 = vunpack.c.l.b16 %v130
    %v1176 = vunpack.c.l.b16 %v131
    %v1177 = vunpack.c.l.b16 %v132
    %v1178 = vunpack.c.l.b16 %v133
    %v1179 = vunpack.c.l.b16 %v134
    %v1180 = vunpack.c.l.b16 %v135
    %v1181 = vunpack.c.l.b16 %v136
    %v1182 = vunpack.c.l.b16 %v137
    %v1183 = vunpack.c.l.b16 %v138
    %v1184 = vunpack.c.l.b16 %v139
    %v1185 = vunpack.c.l.b16 %v140
    %v1186 = vunpack.c.l.b16 %v141
    %v1187 = vunpack.c.l.b16 %v142
    %v1188 = vunpack.c.l.b16 %v143
    %v1189 = vunpack.c.l.b16 %v144
    %v1190 = vunpack.c.l.b16 %v145
    %v1191 = vunpack.c.l.b16 %v146
    %v1192 = vunpack.c.l.b16 %v147
    %v1193 = vunpack.c.l.b16 %v148
    %v1194 = vunpack.c.l.b16 %v149
    %v1195 = vunpack.c.l.b16 %v150
    %v1196 = vunpack.c.l.b16 %v151
    %v1197 = vunpack.c.l.b16 %v152
    %v1198 = vunpack.c.l.b16 %v153
    %v1199 = vunpack.c.l.b16 %v154
    %v1200 = vunpack.c.l.b16 %v155
    %v1201 = vunpack.c.l.b16 %v156
    %v1202 = vpack.c.b16 %v1075, %v1074
    %v1203 = vpack.c.b16 %v1077, %v1076
    %v1204 = vpack.c.b16 %v1079, %v1078
    %v1205 = vpack.c.b16 %v1081, %v1080
    %v1206 = vpack.c.b16 %v1083, %v1082
    %v1207 = vpack.c.b16 %v1085, %v1084
    %v1208 = vpack.c.b16 %v1087, %v1086
    %v1209 = vpack.c.b16 %v1089, %v1088
    %v1210 = vpack.c.b16 %v1091, %v1090
    %v1211 = vpack.c.b16 %v1093, %v1092
    %v1212 = vpack.c.b16 %v1095, %v1094
    %v1213 = vpack.c.b16 %v1097, %v1096
    %v1214 = vpack.c.b16 %v1099, %v1098
    %v1215 = vpack.c.b16 %v1101, %v1100
    %v1216 = vpack.c.b16 %v1103, %v1102
    %v1217 = vpack.c.b16 %v1105, %v1104
    %v1218 = vpack.c.b16 %v1107, %v1106
    %v1219 = vpack.c.b16 %v1109, %v1108
    %v1220 = vpack.c.b16 %v1111, %v1110
    %v1221 = vpack.c.b16 %v1113, %v1112
    %v1222 = vpack.c.b16 %v1115, %v1114
    %v1223 = vpack.c.b16 %v1117, %v1116
    %v1224 = vpack.c.b16 %v1119, %v1118
    %v1225 = vpack.c.b16 %v1121, %v1120
    %v1226 = vpack.c.b16 %v1123, %v1122
    %v1227 = vpack.c.b16 %v1125, %v1124
    %v1228 = vpack.c.b16 %v1127, %v1126
    %v1229 = vpack.c.b16 %v1129, %v1128
    %v1230 = vpack.c.b16 %v1131, %v1130
    %v1231 = vpack.c.b16 %v1133, %v1132
    %v1232 = vpack.c.b16 %v1135, %v1134
    %v1233 = vpack.c.b16 %v1137, %v1136
    %v1234 = vpack.c.b16 %v1139, %v1138
    %v1235 = vpack.c.b16 %v1141, %v1140
    %v1236 = vpack.c.b16 %v1143, %v1142
    %v1237 = vpack.c.b16 %v1145, %v1144
    %v1238 = vpack.c.b16 %v1147, %v1146
    %v1239 = vpack.c.b16 %v1149, %v1148
    %v1240 = vpack.c.b16 %v1151, %v1150
    %v1241 = vpack.c.b16 %v1153, %v1152
    %v1242 = vpack.c.b16 %v1155, %v1154
    %v1243 = vpack.c.b16 %v1157, %v1156
    %v1244 = vpack.c.b16 %v1159, %v1158
    %v1245 = vpack.c.b16 %v1161, %v1160
    %v1246 = vpack.c.b16 %v1163, %v1162
    %v1247 = vpack.c.b16 %v1165, %v1164
    %v1248 = vpack.c.b16 %v1167, %v1166
    %v1249 = vpack.c.b16 %v1169, %v1168
    %v1250 = vpack.c.b16 %v1171, %v1170
    %v1251 = vpack.c.b16 %v1173, %v1172
    %v1252 = vpack.c.b16 %v1175, %v1174
    %v1253 = vpack.c.b16 %v1177, %v1176
    %v1254 = vpack.c.b16 %v1179, %v1178
    %v1255 = vpack.c.b16 %v1181, %v1180
    %v1256 = vpack.c.b16 %v1183, %v1182
    %v1257 = vpack.c.b16 %v1185, %v1184
    %v1258 = vpack.c.b16 %v1187, %v1186
    %v1259 = vpack.c.b16 %v1189, %v1188
    %v1260 = vpack.c.b16 %v1191, %v1190
    %v1261 = vpack.c.b16 %v1193, %v1192
    %v1262 = vpack.c.b16 %v1195, %v1194
    %v1263 = vpack.c.b16 %v1197, %v1196
    %v1264 = vpack.c.b16 %v1199, %v1198
    %v1265 = vpack.c.b16 %v1201, %v1200
    %1330 = vmatprep.subr.bf16.mxu0 0
    %1331 = vmatpush1.bf16.msra.mxu0 %v1202
    %1332 = vmatprep.subr.bf16.mxu0 0
    %1333 = vmatpush1.bf16.msra.mxu0 %v1203
    %1334 = vmatprep.subr.bf16.mxu0 0
    %1335 = vmatpush1.bf16.msra.mxu0 %v1204
    %1336 = vmatprep.subr.bf16.mxu0 0
    %1337 = vmatpush1.bf16.msra.mxu0 %v1205
    %1338 = vmatprep.subr.bf16.mxu0 0
    %1339 = vmatpush1.bf16.msra.mxu0 %v1206
    %1340 = vmatprep.subr.bf16.mxu0 0
    %1341 = vmatpush1.bf16.msra.mxu0 %v1207
    %1342 = vmatprep.subr.bf16.mxu0 0
    %1343 = vmatpush1.bf16.msra.mxu0 %v1208
    %1344 = vmatprep.subr.bf16.mxu0 0
    %1345 = vmatpush1.bf16.msra.mxu0 %v1209
    %1346 = vmatprep.subr.bf16.mxu0 0
    %1347 = vmatpush1.bf16.msra.mxu0 %v1210
    %1348 = vmatprep.subr.bf16.mxu0 0
    %1349 = vmatpush1.bf16.msra.mxu0 %v1211
    %1350 = vmatprep.subr.bf16.mxu0 0
    %1351 = vmatpush1.bf16.msra.mxu0 %v1212
    %1352 = vmatprep.subr.bf16.mxu0 0
    %1353 = vmatpush1.bf16.msra.mxu0 %v1213
    %1354 = vmatprep.subr.bf16.mxu0 0
    %1355 = vmatpush1.bf16.msra.mxu0 %v1214
    %1356 = vmatprep.subr.bf16.mxu0 0
    %1357 = vmatpush1.bf16.msra.mxu0 %v1215
    %1358 = vmatprep.subr.bf16.mxu0 0
    %1359 = vmatpush1.bf16.msra.mxu0 %v1216
    %1360 = vmatprep.subr.bf16.mxu0 0
    %1361 = vmatpush1.bf16.msra.mxu0 %v1217
    %1362 = vmatprep.mubr.bf16.mxu0 %v926
    %1363 = vmatmul.mubr.bf16.gmra.mrb[0].mxu0 %v912
    %v1364 = vpop.f32.mrb[0].mxu0
    %v1365 = vadd.f32 %v883, %v1364
    %v1366 = vpop.f32.mrb[0].mxu0
    %v1367 = vpop.f32.mrb[0].mxu0
    %v1368 = vpop.f32.mrb[0].mxu0
    %1369 = vdwg.mxu0
    %1370 = vmatprep.subr.bf16.mxu0 0
    %1371 = vmatpush1.bf16.msra.mxu0 %v1218
    %1372 = vmatprep.subr.bf16.mxu0 0
    %1373 = vmatpush1.bf16.msra.mxu0 %v1219
    %1374 = vmatprep.subr.bf16.mxu0 0
    %1375 = vmatpush1.bf16.msra.mxu0 %v1220
    %1376 = vmatprep.subr.bf16.mxu0 0
    %1377 = vmatpush1.bf16.msra.mxu0 %v1221
    %1378 = vmatprep.subr.bf16.mxu0 0
    %1379 = vmatpush1.bf16.msra.mxu0 %v1222
    %1380 = vmatprep.subr.bf16.mxu0 0
    %1381 = vmatpush1.bf16.msra.mxu0 %v1223
    %1382 = vmatprep.subr.bf16.mxu0 0
    %1383 = vmatpush1.bf16.msra.mxu0 %v1224
    %1384 = vmatprep.subr.bf16.mxu0 0
    %1385 = vmatpush1.bf16.msra.mxu0 %v1225
    %1386 = vmatprep.subr.bf16.mxu0 0
    %1387 = vmatpush1.bf16.msra.mxu0 %v1226
    %1388 = vmatprep.subr.bf16.mxu0 0
    %1389 = vmatpush1.bf16.msra.mxu0 %v1227
    %1390 = vmatprep.subr.bf16.mxu0 0
    %1391 = vmatpush1.bf16.msra.mxu0 %v1228
    %1392 = vmatprep.subr.bf16.mxu0 0
    %1393 = vmatpush1.bf16.msra.mxu0 %v1229
    %1394 = vmatprep.subr.bf16.mxu0 0
    %1395 = vmatpush1.bf16.msra.mxu0 %v1230
    %1396 = vmatprep.subr.bf16.mxu0 0
    %1397 = vmatpush1.bf16.msra.mxu0 %v1231
    %1398 = vmatprep.subr.bf16.mxu0 0
    %1399 = vmatpush1.bf16.msra.mxu0 %v1232
    %1400 = vmatprep.subr.bf16.mxu0 0
    %1401 = vmatpush1.bf16.msra.mxu0 %v1233
    %1402 = vmatprep.mubr.bf16.mxu0 %v936
    %1403 = vmatmul.mubr.bf16.gmra.mrb[0].mxu0 %v934
    %v1404 = vpop.f32.mrb[0].mxu0
    %v1405 = vadd.f32 %v1365, %v1404
    %v1406 = vpop.f32.mrb[0].mxu0
    %v1407 = vpop.f32.mrb[0].mxu0
    %v1408 = vpop.f32.mrb[0].mxu0
    %1409 = vdwg.mxu0
    %1410 = vmatprep.subr.bf16.mxu0 0
    %1411 = vmatpush1.bf16.msra.mxu0 %v1234
    %1412 = vmatprep.subr.bf16.mxu0 0
    %1413 = vmatpush1.bf16.msra.mxu0 %v1235
    %1414 = vmatprep.subr.bf16.mxu0 0
    %1415 = vmatpush1.bf16.msra.mxu0 %v1236
    %1416 = vmatprep.subr.bf16.mxu0 0
    %1417 = vmatpush1.bf16.msra.mxu0 %v1237
    %1418 = vmatprep.subr.bf16.mxu0 0
    %1419 = vmatpush1.bf16.msra.mxu0 %v1238
    %1420 = vmatprep.subr.bf16.mxu0 0
    %1421 = vmatpush1.bf16.msra.mxu0 %v1239
    %1422 = vmatprep.subr.bf16.mxu0 0
    %1423 = vmatpush1.bf16.msra.mxu0 %v1240
    %1424 = vmatprep.subr.bf16.mxu0 0
    %1425 = vmatpush1.bf16.msra.mxu0 %v1241
    %1426 = vmatprep.subr.bf16.mxu0 0
    %1427 = vmatpush1.bf16.msra.mxu0 %v1242
    %1428 = vmatprep.subr.bf16.mxu0 0
    %1429 = vmatpush1.bf16.msra.mxu0 %v1243
    %1430 = vmatprep.subr.bf16.mxu0 0
    %1431 = vmatpush1.bf16.msra.mxu0 %v1244
    %1432 = vmatprep.subr.bf16.mxu0 0
    %1433 = vmatpush1.bf16.msra.mxu0 %v1245
    %1434 = vmatprep.subr.bf16.mxu0 0
    %1435 = vmatpush1.bf16.msra.mxu0 %v1246
    %1436 = vmatprep.subr.bf16.mxu0 0
    %1437 = vmatpush1.bf16.msra.mxu0 %v1247
    %1438 = vmatprep.subr.bf16.mxu0 0
    %1439 = vmatpush1.bf16.msra.mxu0 %v1248
    %1440 = vmatprep.subr.bf16.mxu0 0
    %1441 = vmatpush1.bf16.msra.mxu0 %v1249
    %1442 = vmatprep.mubr.bf16.mxu0 %v933
    %1443 = vmatmul.mubr.bf16.gmra.mrb[0].mxu0 %v919
    %v1444 = vpop.f32.mrb[0].mxu0
    %v1445 = vadd.f32 %v1405, %v1444
    %v1446 = vpop.f32.mrb[0].mxu0
    %v1447 = vpop.f32.mrb[0].mxu0
    %v1448 = vpop.f32.mrb[0].mxu0
    %1449 = vdwg.mxu0
    %1450 = vmatprep.subr.bf16.mxu0 0
    %1451 = vmatpush1.bf16.msra.mxu0 %v1250
    %1452 = vmatprep.subr.bf16.mxu0 0
    %1453 = vmatpush1.bf16.msra.mxu0 %v1251
    %1454 = vmatprep.subr.bf16.mxu0 0
    %1455 = vmatpush1.bf16.msra.mxu0 %v1252
    %1456 = vmatprep.subr.bf16.mxu0 0
    %1457 = vmatpush1.bf16.msra.mxu0 %v1253
    %1458 = vmatprep.subr.bf16.mxu0 0
    %1459 = vmatpush1.bf16.msra.mxu0 %v1254
    %1460 = vmatprep.subr.bf16.mxu0 0
    %1461 = vmatpush1.bf16.msra.mxu0 %v1255
    %1462 = vmatprep.subr.bf16.mxu0 0
    %1463 = vmatpush1.bf16.msra.mxu0 %v1256
    %1464 = vmatprep.subr.bf16.mxu0 0
    %1465 = vmatpush1.bf16.msra.mxu0 %v1257
    %1466 = vmatprep.subr.bf16.mxu0 0
    %1467 = vmatpush1.bf16.msra.mxu0 %v1258
    %1468 = vmatprep.subr.bf16.mxu0 0
    %1469 = vmatpush1.bf16.msra.mxu0 %v1259
    %1470 = vmatprep.subr.bf16.mxu0 0
    %1471 = vmatpush1.bf16.msra.mxu0 %v1260
    %1472 = vmatprep.subr.bf16.mxu0 0
    %1473 = vmatpush1.bf16.msra.mxu0 %v1261
    %1474 = vmatprep.subr.bf16.mxu0 0
    %1475 = vmatpush1.bf16.msra.mxu0 %v1262
    %1476 = vmatprep.subr.bf16.mxu0 0
    %1477 = vmatpush1.bf16.msra.mxu0 %v1263
    %1478 = vmatprep.subr.bf16.mxu0 0
    %1479 = vmatpush1.bf16.msra.mxu0 %v1264
    %1480 = vmatprep.subr.bf16.mxu0 0
    %1481 = vmatpush1.bf16.msra.mxu0 %v1265
    %1482 = vmatprep.mubr.bf16.mxu0 %v937
    %1483 = vmatmul.mubr.bf16.gmra.mrb[0].mxu0 %v935
    %v1484 = vpop.f32.mrb[0].mxu0
    %v1485 = vadd.f32 %v1445, %v1484
    %v1486 = vpop.f32.mrb[0].mxu0
    %v1487 = vpop.f32.mrb[0].mxu0
    %v1488 = vpop.f32.mrb[0].mxu0
    %1489 = vdwg.mxu0
    %v1490 = vld [vmem:[%s4] sm:$0x1]
    %v1492 = vlaneseq
    %v1493 = vshrl.u32 %v1492, 7
    %v1494 = vsub.s32 0, %v1493
    %v1495 = vrot.slane %v1490, %v1494
    %v1497 = vadd.f32 %v1485, %v1495
    %v1498 = vld [vmem:[%s6] sm:$0x3]
    %v1499 = vmul.f32 %v1497, 0.5
    %v1500 = vmul.f32 %v1499, 1.442695
    %v1501 = vpow.pop %v1500
    %1503 = vrot.lane.b32.xlu0 %v1501, 84
    %v1504 = vpop.permute.xlu0 %1503
    %v1506 = vmul.f32 %v1498, %v1504
    %v1507 = vadd.f32 %v1497, %v1506
    %v1508 = vld [vmem:[%s5] sm:$0xff]
    %v1509 = vld [vmem:[%s5 + $0x8] sm:$0xff]
    %v1510 = vld [vmem:[%s5 + $0x10] sm:$0xff]
    %v1511 = vld [vmem:[%s5 + $0x18] sm:$0xff]
    %v1512 = vld [vmem:[%s5 + $0x20] sm:$0xff]
    %v1513 = vld [vmem:[%s5 + $0x28] sm:$0xf]
    %1514 = vrot.lane.b32.xlu0 %v1495, 40
    %v1515 = vpop.permute.xlu0 %1514
    %vm1517 = vcmask 359424
    %v1519 = vsel %vm1517, %v1507, 0
    %vm1521 = vcmask 1043456
    %v1523 = vsel %vm1521, %v1513, 0
    %1525 = vmatprep.subr.mxu0 0.0
    %1526 = vmatpush1.msra.mxu0 %v1508
    %1527 = vmatprep.subr.mxu0 0.0
    %1528 = vmatpush1.msra.mxu0 %v1509
    %1529 = vmatprep.subr.mxu0 0.0
    %1530 = vmatpush1.msra.mxu0 %v1510
    %1531 = vmatprep.subr.mxu0 0.0
    %1532 = vmatpush1.msra.mxu0 %v1511
    %1533 = vmatprep.subr.mxu0 0.0
    %1534 = vmatpush1.msra.mxu0 %v1512
    %1535 = vmatprep.subr.mxu0 0.0
    %1536 = vmatpush1.msra.mxu0 %v1523
    %1537 = vmatprep.subr.mxu0 0.0
    %1538 = vmatpush1.msra.mxu0 0.0
    %1539 = vmatprep.subr.mxu0 0.0
    %1540 = vmatpush1.msra.mxu0 0.0
    %1541 = vmatprep.subr.mxu0 0.0
    %1542 = vmatpush1.msra.mxu0 0.0
    %1543 = vmatprep.subr.mxu0 0.0
    %1544 = vmatpush1.msra.mxu0 0.0
    %1545 = vmatprep.subr.mxu0 0.0
    %1546 = vmatpush1.msra.mxu0 0.0
    %1547 = vmatprep.subr.mxu0 0.0
    %1548 = vmatpush1.msra.mxu0 0.0
    %1549 = vmatprep.subr.mxu0 0.0
    %1550 = vmatpush1.msra.mxu0 0.0
    %1551 = vmatprep.subr.mxu0 0.0
    %1552 = vmatpush1.msra.mxu0 0.0
    %1553 = vmatprep.subr.mxu0 0.0
    %1554 = vmatpush1.msra.mxu0 0.0
    %1555 = vmatprep.subr.mxu0 0.0
    %1556 = vmatpush1.msra.mxu0 0.0
    %1557 = vmatprep.subr.mxu0 0.0
    %1558 = vmatpush1.msra.mxu0 0.0
    %1559 = vmatprep.subr.mxu0 0.0
    %1560 = vmatpush1.msra.mxu0 0.0
    %1561 = vmatprep.subr.mxu0 0.0
    %1562 = vmatpush1.msra.mxu0 0.0
    %1563 = vmatprep.subr.mxu0 0.0
    %1564 = vmatpush1.msra.mxu0 0.0
    %1565 = vmatprep.subr.mxu0 0.0
    %1566 = vmatpush1.msra.mxu0 0.0
    %1567 = vmatprep.subr.mxu0 0.0
    %1568 = vmatpush1.msra.mxu0 0.0
    %1569 = vmatprep.subr.mxu0 0.0
    %1570 = vmatpush1.msra.mxu0 0.0
    %1571 = vmatprep.subr.mxu0 0.0
    %1572 = vmatpush1.msra.mxu0 0.0
    %1573 = vmatprep.subr.mxu0 0.0
    %1574 = vmatpush1.msra.mxu0 0.0
    %1575 = vmatprep.subr.mxu0 0.0
    %1576 = vmatpush1.msra.mxu0 0.0
    %1577 = vmatprep.subr.mxu0 0.0
    %1578 = vmatpush1.msra.mxu0 0.0
    %1579 = vmatprep.subr.mxu0 0.0
    %1580 = vmatpush1.msra.mxu0 0.0
    %1581 = vmatprep.subr.mxu0 0.0
    %1582 = vmatpush1.msra.mxu0 0.0
    %1583 = vmatprep.subr.mxu0 0.0
    %1584 = vmatpush1.msra.mxu0 0.0
    %1585 = vmatprep.subr.mxu0 0.0
    %1586 = vmatpush1.msra.mxu0 0.0
    %1587 = vmatprep.subr.mxu0 0.0
    %1588 = vmatpush1.msra.mxu0 0.0
    %1589 = vmatprep.mubr.f32.mxu0 0.0
    %1590 = vmatmul.mubr.f32.gmra.mrb[0].mxu0 %v1519
    %v1591 = vpop.f32.mrb[0].mxu0
    %v1592 = vadd.f32 %v1515, %v1591
    %v1593 = vpop.f32.mrb[0].mxu0
    %1594 = vdwg.mxu0
    %vm1595 = vcmask 74752
    %1596 = vst.msk [vmem:[#allocation2] sm:$0x3] %vm1595, %v1592
    // Predicated region
    $region30: #{tpu_custom_call.1} parent=1 // pred_check
      _
    $region31: #{tpu_custom_call.1} parent=1 // pred_check_branch
      %1598 = sbr.rel (0) target = $region33
    $region32: #{tpu_custom_call.1} parent=1 // pred_region
      %s1600 = ssub.s32 32, 32
      %1601 = vsyncadd [#allocation3], %s1600
      %s1603 = sshll.u32 [#allocation2], 4
      %s1604 = int_to_ptr.vmem [resolvable:$true] %s1603
      %1606 = dma.vmem_to_hbm [thread:$0]  %s1604, 32, %s7, [#allocation3]
    $region33: #{tpu_custom_call.1} parent=1 // pred_fallthru
      _
    // Predicated region
    $region34: #{tpu_custom_call.1} parent=1 // pred_check
      _
    $region35: #{tpu_custom_call.1} parent=1 // pred_check_branch
      %1608 = sbr.rel (0) target = $region37
    $region36: #{tpu_custom_call.1} parent=1 // pred_region
      %1609 = dma.done [#allocation3], 32
    $region37: #{tpu_custom_call.1} parent=1 // pred_fallthru
      _
    %1610 = vsyncpa [#allocation3], 1

</llo_original>
